<compile_context>
chip_gen: v7x
topology: tpu7x:2x2x1
jax: 0.10.0
libtpu: 0.0.40
codegen_flags: <defaults>
</compile_context>

<pallas_src>
import numpy as np
import jax
import jax.numpy as jnp
from jax.experimental import pallas as pl
from jax.experimental.pallas import tpu as pltpu

_WIN = 8                      # box filter size
_C1 = 0.01 ** 2
_C2 = 0.03 ** 2
# 1/64 normalization folded into the constants (the common 4096 factor cancels in a/b).
_NORM = float(_WIN * _WIN)            # 64
_C1S = _C1 * _NORM * _NORM            # 0.4096
_C2S = _C2 * _NORM * _NORM            # 3.6864


def _ssim_kernel(x_ref, y_ref, bh_ref, bw_ref, o_ref):
    # x_ref, y_ref : (H, C*W)     lane-dense slab for the current batch item
    # bh_ref       : (Ho, H)      row-window band of ones
    # bw_ref       : (C*W, C*Wo)  block-diagonal per-channel column-window band
    # o_ref        : (1, 1)       per-batch SSIM (mean over channels & windows)
    x = x_ref[...]
    y = y_ref[...]
    bh = bh_ref[...]
    bw = bw_ref[...]

    def boxsum(img):
        # 8x8 window SUMS via two MXU matmuls (no lane-shifted slices).
        t = jnp.dot(bh, img, preferred_element_type=jnp.float32)    # (Ho, C*W)
        return jnp.dot(t, bw, preferred_element_type=jnp.float32)   # (Ho, C*Wo)

    s_i = boxsum(x)          # 64 * mu_i
    s_t = boxsum(y)          # 64 * mu_t
    ss_ii = boxsum(x * x)
    ss_tt = boxsum(y * y)
    ss_it = boxsum(x * y)

    si_st = s_i * s_t
    si2 = s_i * s_i
    st2 = s_t * s_t

    # a = (2*mu_i*mu_t + C1)(2*cov + C2), b = (mu_i^2+mu_t^2+C1)(var_i+var_t+C2),
    # rewritten in terms of window sums with the 4096 factor folded into C1S/C2S.
    a = (2.0 * si_st + _C1S) * (2.0 * (_NORM * ss_it - si_st) + _C2S)
    b = (si2 + st2 + _C1S) * (_NORM * (ss_ii + ss_tt) - si2 - st2 + _C2S)
    ssim_map = a / b

    # Global mean over (Ho, C*Wo) == (1/C) * sum_c per-channel window mean.
    o_ref[...] = jnp.mean(ssim_map, axis=(0, 1), keepdims=True)


def _band_matrices(C, H, W):
    Ho, Wo = H - (_WIN - 1), W - (_WIN - 1)
    bh = np.zeros((Ho, H), np.float32)
    for i in range(Ho):
        bh[i, i:i + _WIN] = 1.0
    bw1 = np.zeros((W, Wo), np.float32)
    for k in range(Wo):
        bw1[k:k + _WIN, k] = 1.0
    bw = np.kron(np.eye(C, dtype=np.float32), bw1)  # (C*W, C*Wo), block diagonal
    return jnp.asarray(bh), jnp.asarray(bw)


def ssim(input_tensor, target_tensor):
    """SSIM matching the PyTorch module: returns shape (B,) float32."""
    B, C, H, W = input_tensor.shape
    assert H >= _WIN and W >= _WIN, "spatial dims must be >= 8"
    Ho, Wo = H - (_WIN - 1), W - (_WIN - 1)
    CW, CWo = C * W, C * Wo

    # Lane-dense layout: channels side by side along the last (lane) axis.
    x2 = jnp.transpose(input_tensor, (0, 2, 1, 3)).reshape(B, H, CW).astype(jnp.float32)
    y2 = jnp.transpose(target_tensor, (0, 2, 1, 3)).reshape(B, H, CW).astype(jnp.float32)
    bh, bw = _band_matrices(C, H, W)

    per_b = pl.pallas_call(
        _ssim_kernel,
        out_shape=jax.ShapeDtypeStruct((B, 1, 1), jnp.float32),
        grid=(B,),
        in_specs=[
            pl.BlockSpec((None, H, CW), lambda b: (b, 0, 0)),
            pl.BlockSpec((None, H, CW), lambda b: (b, 0, 0)),
            pl.BlockSpec((Ho, H), lambda b: (0, 0)),
            pl.BlockSpec((CW, CWo), lambda b: (0, 0)),
        ],
        out_specs=pl.BlockSpec((None, 1, 1), lambda b: (b, 0, 0)),
        compiler_params=pltpu.CompilerParams(
            dimension_semantics=("parallel",),
            vmem_limit_bytes=48 * 1024 * 1024,
        ),
    )(x2, y2, bh, bw)

    return per_b.reshape(B)


def _ssim_reference(x, y):
    """Pure numpy reference reproducing the PyTorch semantics exactly."""
    x = np.asarray(x, dtype=np.float64)
    y = np.asarray(y, dtype=np.float64)
    B, C, H, W = x.shape
    Ho, Wo = H - (_WIN - 1), W - (_WIN - 1)

    def conv_box(img):  # img: (B, H, W) -> (B, Ho, Wo)
        out = np.zeros((img.shape[0], Ho, Wo))
        for i in range(Ho):
            for j in range(Wo):
                out[:, i, j] = img[:, i:i + _WIN, j:j + _WIN].mean(axis=(1, 2))
        return out

    total = np.zeros((B,))
    for c in range(C):
        xc, yc = x[:, c], y[:, c]
        mu_i, mu_t = conv_box(xc), conv_box(yc)
        var_i = conv_box(xc * xc) - mu_i ** 2
        var_t = conv_box(yc * yc) - mu_t ** 2
        cov = conv_box(xc * yc) - mu_i * mu_t
        a = (2 * mu_i * mu_t + _C1) * (2 * cov + _C2)
        b = (mu_i ** 2 + mu_t ** 2 + _C1) * (var_i + var_t + _C2)
        total += (a / b).reshape(B, -1).mean(axis=1)
    return total / C


if __name__ == "__main__":
    key = jax.random.PRNGKey(0)
    k1, k2 = jax.random.split(key)
    B, C, H, W = 2, 4, 16, 16
    x = jax.random.uniform(k1, (B, C, H, W), dtype=jnp.float32)
    y = jax.random.uniform(k2, (B, C, H, W), dtype=jnp.float32)

    out = ssim(x, y)
    jax.block_until_ready(out)

    ref = _ssim_reference(np.array(x), np.array(y))
    np.testing.assert_allclose(np.array(out), ref, rtol=1e-4, atol=1e-5)

    print("KERNEL_OK")
</pallas_src>

<mosaic_0001>
module attributes {stable_mosaic.version = 11 : i64} {
  func.func @_ssim_kernel(%arg0: i32, %arg1: memref<1x16x64xf32, #tpu.memory_space<vmem>>, %arg2: memref<1x16x64xf32, #tpu.memory_space<vmem>>, %arg3: memref<9x16xf32, #tpu.memory_space<vmem>>, %arg4: memref<64x36xf32, #tpu.memory_space<vmem>>, %arg5: memref<1x1x1xf32, #tpu.memory_space<vmem>>) attributes {dimension_semantics = [#tpu.dimension_semantics<parallel>], iteration_bounds = array<i64: 2>, scalar_prefetch = 0 : i64, scratch_operands = 0 : i64, tpu.core_type = #tpu.core_type<tc>, window_params = [{transform_indices = @transform_0, window_bounds = array<i64: 1, 16, 64>}, {transform_indices = @transform_1, window_bounds = array<i64: 1, 16, 64>}, {pipeline_mode = #tpu.pipeline_mode<synchronous>, transform_indices = @transform_2, window_bounds = array<i64: 9, 16>}, {pipeline_mode = #tpu.pipeline_mode<synchronous>, transform_indices = @transform_3, window_bounds = array<i64: 64, 36>}, {transform_indices = @transform_4, window_bounds = array<i64: 1, 1, 1>}]} {
    %c0 = arith.constant 0 : index
    %c0_0 = arith.constant 0 : index
    %c0_1 = arith.constant 0 : index
    %0 = vector.load %arg1[%c0, %c0_0, %c0_1] : memref<1x16x64xf32, #tpu.memory_space<vmem>>, vector<1x16x64xf32>
    %1 = vector.shape_cast %0 : vector<1x16x64xf32> to vector<16x64xf32>
    %c0_2 = arith.constant 0 : index
    %c0_3 = arith.constant 0 : index
    %c0_4 = arith.constant 0 : index
    %2 = vector.load %arg2[%c0_2, %c0_3, %c0_4] : memref<1x16x64xf32, #tpu.memory_space<vmem>>, vector<1x16x64xf32>
    %3 = vector.shape_cast %2 : vector<1x16x64xf32> to vector<16x64xf32>
    %c0_5 = arith.constant 0 : index
    %c0_6 = arith.constant 0 : index
    %4 = vector.load %arg3[%c0_5, %c0_6] : memref<9x16xf32, #tpu.memory_space<vmem>>, vector<9x16xf32>
    %c0_7 = arith.constant 0 : index
    %c0_8 = arith.constant 0 : index
    %5 = vector.load %arg4[%c0_7, %c0_8] : memref<64x36xf32, #tpu.memory_space<vmem>>, vector<64x36xf32>
    %cst = arith.constant dense<0.000000e+00> : vector<9x64xf32>
    %6 = tpu.matmul %4, %1, %cst {dimension_numbers = #tpu.dot_dimension_numbers<[1], [0], [0], [1], [0, 0, 1, 1], [], []>} : vector<9x16xf32>, vector<16x64xf32>, vector<9x64xf32> -> vector<9x64xf32>
    %cst_9 = arith.constant dense<0.000000e+00> : vector<9x36xf32>
    %7 = tpu.matmul %6, %5, %cst_9 {dimension_numbers = #tpu.dot_dimension_numbers<[1], [0], [0], [1], [0, 0, 1, 1], [], []>} : vector<9x64xf32>, vector<64x36xf32>, vector<9x36xf32> -> vector<9x36xf32>
    %cst_10 = arith.constant dense<0.000000e+00> : vector<9x64xf32>
    %8 = tpu.matmul %4, %3, %cst_10 {dimension_numbers = #tpu.dot_dimension_numbers<[1], [0], [0], [1], [0, 0, 1, 1], [], []>} : vector<9x16xf32>, vector<16x64xf32>, vector<9x64xf32> -> vector<9x64xf32>
    %cst_11 = arith.constant dense<0.000000e+00> : vector<9x36xf32>
    %9 = tpu.matmul %8, %5, %cst_11 {dimension_numbers = #tpu.dot_dimension_numbers<[1], [0], [0], [1], [0, 0, 1, 1], [], []>} : vector<9x64xf32>, vector<64x36xf32>, vector<9x36xf32> -> vector<9x36xf32>
    %10 = arith.mulf %1, %1 : vector<16x64xf32>
    %cst_12 = arith.constant dense<0.000000e+00> : vector<9x64xf32>
    %11 = tpu.matmul %4, %10, %cst_12 {dimension_numbers = #tpu.dot_dimension_numbers<[1], [0], [0], [1], [0, 0, 1, 1], [], []>} : vector<9x16xf32>, vector<16x64xf32>, vector<9x64xf32> -> vector<9x64xf32>
    %cst_13 = arith.constant dense<0.000000e+00> : vector<9x36xf32>
    %12 = tpu.matmul %11, %5, %cst_13 {dimension_numbers = #tpu.dot_dimension_numbers<[1], [0], [0], [1], [0, 0, 1, 1], [], []>} : vector<9x64xf32>, vector<64x36xf32>, vector<9x36xf32> -> vector<9x36xf32>
    %13 = arith.mulf %3, %3 : vector<16x64xf32>
    %cst_14 = arith.constant dense<0.000000e+00> : vector<9x64xf32>
    %14 = tpu.matmul %4, %13, %cst_14 {dimension_numbers = #tpu.dot_dimension_numbers<[1], [0], [0], [1], [0, 0, 1, 1], [], []>} : vector<9x16xf32>, vector<16x64xf32>, vector<9x64xf32> -> vector<9x64xf32>
    %cst_15 = arith.constant dense<0.000000e+00> : vector<9x36xf32>
    %15 = tpu.matmul %14, %5, %cst_15 {dimension_numbers = #tpu.dot_dimension_numbers<[1], [0], [0], [1], [0, 0, 1, 1], [], []>} : vector<9x64xf32>, vector<64x36xf32>, vector<9x36xf32> -> vector<9x36xf32>
    %16 = arith.mulf %1, %3 : vector<16x64xf32>
    %cst_16 = arith.constant dense<0.000000e+00> : vector<9x64xf32>
    %17 = tpu.matmul %4, %16, %cst_16 {dimension_numbers = #tpu.dot_dimension_numbers<[1], [0], [0], [1], [0, 0, 1, 1], [], []>} : vector<9x16xf32>, vector<16x64xf32>, vector<9x64xf32> -> vector<9x64xf32>
    %cst_17 = arith.constant dense<0.000000e+00> : vector<9x36xf32>
    %18 = tpu.matmul %17, %5, %cst_17 {dimension_numbers = #tpu.dot_dimension_numbers<[1], [0], [0], [1], [0, 0, 1, 1], [], []>} : vector<9x64xf32>, vector<64x36xf32>, vector<9x36xf32> -> vector<9x36xf32>
    %19 = arith.mulf %7, %9 : vector<9x36xf32>
    %20 = arith.mulf %7, %7 : vector<9x36xf32>
    %21 = arith.mulf %9, %9 : vector<9x36xf32>
    %cst_18 = arith.constant 2.000000e+00 : f32
    %22 = vector.broadcast %cst_18 : f32 to vector<9x36xf32>
    %23 = arith.mulf %22, %19 : vector<9x36xf32>
    %cst_19 = arith.constant 4.096000e-01 : f32
    %24 = vector.broadcast %cst_19 : f32 to vector<9x36xf32>
    %25 = arith.addf %23, %24 : vector<9x36xf32>
    %cst_20 = arith.constant 6.400000e+01 : f32
    %26 = vector.broadcast %cst_20 : f32 to vector<9x36xf32>
    %27 = arith.mulf %26, %18 : vector<9x36xf32>
    %28 = arith.subf %27, %19 : vector<9x36xf32>
    %cst_21 = arith.constant 2.000000e+00 : f32
    %29 = vector.broadcast %cst_21 : f32 to vector<9x36xf32>
    %30 = arith.mulf %29, %28 : vector<9x36xf32>
    %cst_22 = arith.constant 3.686400e+00 : f32
    %31 = vector.broadcast %cst_22 : f32 to vector<9x36xf32>
    %32 = arith.addf %30, %31 : vector<9x36xf32>
    %33 = arith.mulf %25, %32 : vector<9x36xf32>
    %34 = arith.addf %20, %21 : vector<9x36xf32>
    %cst_23 = arith.constant 4.096000e-01 : f32
    %35 = vector.broadcast %cst_23 : f32 to vector<9x36xf32>
    %36 = arith.addf %34, %35 : vector<9x36xf32>
    %37 = arith.addf %12, %15 : vector<9x36xf32>
    %cst_24 = arith.constant 6.400000e+01 : f32
    %38 = vector.broadcast %cst_24 : f32 to vector<9x36xf32>
    %39 = arith.mulf %38, %37 : vector<9x36xf32>
    %40 = arith.subf %39, %20 : vector<9x36xf32>
    %41 = arith.subf %40, %21 : vector<9x36xf32>
    %cst_25 = arith.constant 3.686400e+00 : f32
    %42 = vector.broadcast %cst_25 : f32 to vector<9x36xf32>
    %43 = arith.addf %41, %42 : vector<9x36xf32>
    %44 = arith.mulf %36, %43 : vector<9x36xf32>
    %45 = arith.divf %33, %44 : vector<9x36xf32>
    %46 = vector.shape_cast %45 : vector<9x36xf32> to vector<1x9x36xf32>
    %cst_26 = arith.constant dense<0.000000e+00> : vector<1xf32>
    %47 = vector.multi_reduction <add>, %46, %cst_26 [1, 2] : vector<1x9x36xf32> to vector<1xf32>
    %48 = vector.shape_cast %47 : vector<1xf32> to vector<1x1x1xf32>
    %49 = vector.extract %48[0, 0, 0] : f32 from vector<1x1x1xf32>
    %50 = vector.broadcast %49 : f32 to vector<1x1xf32>
    %cst_27 = arith.constant 3.240000e+02 : f32
    %51 = vector.broadcast %cst_27 : f32 to vector<1x1xf32>
    %52 = arith.divf %50, %51 : vector<1x1xf32>
    %c0_28 = arith.constant 0 : index
    %c0_29 = arith.constant 0 : index
    %c0_30 = arith.constant 0 : index
    %53 = vector.load %arg5[%c0_28, %c0_29, %c0_30] : memref<1x1x1xf32, #tpu.memory_space<vmem>>, vector<1x1x1xf32>
    %54 = vector.shape_cast %53 : vector<1x1x1xf32> to vector<1x1xf32>
    %55 = vector.shape_cast %52 : vector<1x1xf32> to vector<1x1x1xf32>
    tpu.vector_store %arg5[%c0_28, %c0_29, %c0_30], %55 {strides = array<i32>} : memref<1x1x1xf32, #tpu.memory_space<vmem>>, vector<1x1x1xf32>,
    return
  }
  func.func @transform_0(%arg0: i32) -> (i32, i32, i32) {
    %c0_i32 = arith.constant 0 : i32
    %c0_i32_0 = arith.constant 0 : i32
    %c0_i32_1 = arith.constant 0 : i32
    return %arg0, %c0_i32, %c0_i32_0 : i32, i32, i32
  }
  func.func @transform_1(%arg0: i32) -> (i32, i32, i32) {
    %c0_i32 = arith.constant 0 : i32
    %c0_i32_0 = arith.constant 0 : i32
    %c0_i32_1 = arith.constant 0 : i32
    return %arg0, %c0_i32, %c0_i32_0 : i32, i32, i32
  }
  func.func @transform_2(%arg0: i32) -> (i32, i32) {
    %c0_i32 = arith.constant 0 : i32
    %c0_i32_0 = arith.constant 0 : i32
    %c0_i32_1 = arith.constant 0 : i32
    return %c0_i32, %c0_i32_0 : i32, i32
  }
  func.func @transform_3(%arg0: i32) -> (i32, i32) {
    %c0_i32 = arith.constant 0 : i32
    %c0_i32_0 = arith.constant 0 : i32
    %c0_i32_1 = arith.constant 0 : i32
    return %c0_i32, %c0_i32_0 : i32, i32
  }
  func.func @transform_4(%arg0: i32) -> (i32, i32, i32) {
    %c0_i32 = arith.constant 0 : i32
    %c0_i32_0 = arith.constant 0 : i32
    %c0_i32_1 = arith.constant 0 : i32
    return %arg0, %c0_i32, %c0_i32_0 : i32, i32, i32
  }
}

</mosaic_0001>

<llo_original>
// kernel: tpu_custom_call.1
$region0: #{tpu_custom_call.1}
  #allocation0 [shape = 'u32[]', space=smem, size = 0x4, offset = 0x4, fixed_abs, tag = 'smem constant byte address 0x4 - core index']
  #allocation1 [shape = 'u32[144,128]{1,0:T(1,128)}', space=vmem, size = 0x12000, scoped, tag = 'internal scratch']
  %s0 = inlined_call_operand.vmem [shape: f32[2,16,64], index: 0, kind: input, shape index: {}]
  %s1 = inlined_call_operand.vmem [shape: f32[2,16,64], index: 1, kind: input, shape index: {}]
  %s2 = inlined_call_operand.vmem [shape: f32[9,16], index: 2, kind: input, shape index: {}]
  %s3 = inlined_call_operand.vmem [shape: f32[64,36], index: 3, kind: input, shape index: {}]
  %s4 = inlined_call_operand.vmem [shape: f32[2,1,1], index: 4, kind: output, shape index: {}]
  %s5 = sld [smem:[#allocation0]]
  $region49: #{tpu_custom_call.1} parent=0
    _
  %s7 = ssub.s32 1, %s5
  %s8 = scalar_select 0, %s7, %s5
  loop: start=0, step=1, limit=4
  $region2: #{tpu_custom_call.1} parent=0 // loop_pre_header
    _
  $region3: #{tpu_custom_call.1} parent=0 // loop_header
    %s10 = sphi 0, %s14
    %p11 = scmp.ge.s32.totalorder %s10, 4
    %s20 = sphi 0, %s22
    %s23 = sphi 0, %s20
    %s24 = sphi 0, %s23
    %s40 = sphi 0, %s24
    %s46 = sphi 0, %s48
    %s49 = sphi 0, %s46
    %s50 = sphi 0, %s49
    %s66 = sphi 0, %s50
    %s70 = sphi 0, %s70
    %s72 = sphi 0, %s70
    %s73 = sphi 0, %s72
    %s87 = sphi 0, %s73
    %s91 = sphi 0, %s91
    %s93 = sphi 0, %s91
    %s94 = sphi 0, %s93
    %s108 = sphi 0, %s94
    %s114 = sphi 0, %s116
    %s117 = sphi 0, %s114
    %s118 = sphi 0, %s117
    %s134 = sphi 0, %s118
  $region4: #{tpu_custom_call.1} parent=0 // loop_header_branch
    %13 = sbr.rel (%p11) target = $region8
  $region5: #{tpu_custom_call.1} parent=0 // loop_body
    %s15 = ssub.s32 %s10, 1
    %s16 = ssub.s32 %s10, 2
    %s17 = sadd.s32 %s10, 1
    %s18 = ssub.s32 %s10, %s17
    %p19 = scmp.eq.s32.totalorder %s18, 0
    %s21 = sadd.s32 %s20, 1
    %s22 = scalar_select %p19, %s20, %s21
    %p25 = pneg %p19
    %p26 = scmp.eq.s32.totalorder %s10, 1
    %p27 = por %p25, %p26
    %p28 = scmp.ne.s32.totalorder %s20, %s23
    %p29 = scmp.eq.s32.totalorder %s10, 0
    %p30 = por %p28, %p29
    %p31 = scmp.ne.s32.totalorder %s20, %s23
    %p32 = scmp.eq.s32.totalorder %s15, 1
    %p33 = por %p31, %p32
    %p34 = scmp.ne.s32.totalorder %s23, %s24
    %p35 = scmp.eq.s32.totalorder %s15, 0
    %p36 = por %p34, %p35
    %p37 = scmp.ne.s32.totalorder %s23, %s24
    %p38 = scmp.eq.s32.totalorder %s16, 1
    %p39 = por %p37, %p38
    %p41 = scmp.ne.s32.totalorder %s24, %s40
    %p42 = scmp.eq.s32.totalorder %s16, 0
    %p43 = por %p41, %p42
    %s44 = ssub.s32 %s10, %s17
    %p45 = scmp.eq.s32.totalorder %s44, 0
    %s47 = sadd.s32 %s46, 1
    %s48 = scalar_select %p45, %s46, %s47
    %p51 = pneg %p45
    %p52 = scmp.eq.s32.totalorder %s10, 1
    %p53 = por %p51, %p52
    %p54 = scmp.ne.s32.totalorder %s46, %s49
    %p55 = scmp.eq.s32.totalorder %s10, 0
    %p56 = por %p54, %p55
    %p57 = scmp.ne.s32.totalorder %s46, %s49
    %p58 = scmp.eq.s32.totalorder %s15, 1
    %p59 = por %p57, %p58
    %p60 = scmp.ne.s32.totalorder %s49, %s50
    %p61 = scmp.eq.s32.totalorder %s15, 0
    %p62 = por %p60, %p61
    %p63 = scmp.ne.s32.totalorder %s49, %s50
    %p64 = scmp.eq.s32.totalorder %s16, 1
    %p65 = por %p63, %p64
    %p67 = scmp.ne.s32.totalorder %s50, %s66
    %p68 = scmp.eq.s32.totalorder %s16, 0
    %p69 = por %p67, %p68
    %s71 = sadd.s32 %s70, 1
    %p74 = scmp.eq.s32.totalorder %s10, 1
    %p75 = scmp.ne.s32.totalorder %s70, %s72
    %p76 = scmp.eq.s32.totalorder %s10, 0
    %p77 = por %p75, %p76
    %p78 = scmp.ne.s32.totalorder %s70, %s72
    %p79 = scmp.eq.s32.totalorder %s15, 1
    %p80 = por %p78, %p79
    %p81 = scmp.ne.s32.totalorder %s72, %s73
    %p82 = scmp.eq.s32.totalorder %s15, 0
    %p83 = por %p81, %p82
    %p84 = scmp.ne.s32.totalorder %s72, %s73
    %p85 = scmp.eq.s32.totalorder %s16, 1
    %p86 = por %p84, %p85
    %p88 = scmp.ne.s32.totalorder %s73, %s87
    %p89 = scmp.eq.s32.totalorder %s16, 0
    %p90 = por %p88, %p89
    %s92 = sadd.s32 %s91, 1
    %p95 = scmp.eq.s32.totalorder %s10, 1
    %p96 = scmp.ne.s32.totalorder %s91, %s93
    %p97 = scmp.eq.s32.totalorder %s10, 0
    %p98 = por %p96, %p97
    %p99 = scmp.ne.s32.totalorder %s91, %s93
    %p100 = scmp.eq.s32.totalorder %s15, 1
    %p101 = por %p99, %p100
    %p102 = scmp.ne.s32.totalorder %s93, %s94
    %p103 = scmp.eq.s32.totalorder %s15, 0
    %p104 = por %p102, %p103
    %p105 = scmp.ne.s32.totalorder %s93, %s94
    %p106 = scmp.eq.s32.totalorder %s16, 1
    %p107 = por %p105, %p106
    %p109 = scmp.ne.s32.totalorder %s94, %s108
    %p110 = scmp.eq.s32.totalorder %s16, 0
    %p111 = por %p109, %p110
    %s112 = ssub.s32 %s10, %s17
    %p113 = scmp.eq.s32.totalorder %s112, 0
    %s115 = sadd.s32 %s114, 1
    %s116 = scalar_select %p113, %s114, %s115
    %p119 = pneg %p113
    %p120 = scmp.eq.s32.totalorder %s10, 1
    %p121 = por %p119, %p120
    %p122 = scmp.ne.s32.totalorder %s114, %s117
    %p123 = scmp.eq.s32.totalorder %s10, 0
    %p124 = por %p122, %p123
    %p125 = scmp.ne.s32.totalorder %s114, %s117
    %p126 = scmp.eq.s32.totalorder %s15, 1
    %p127 = por %p125, %p126
    %p128 = scmp.ne.s32.totalorder %s117, %s118
    %p129 = scmp.eq.s32.totalorder %s15, 0
    %p130 = por %p128, %p129
    %p131 = scmp.ne.s32.totalorder %s117, %s118
    %p132 = scmp.eq.s32.totalorder %s16, 1
    %p133 = por %p131, %p132
    %p135 = scmp.ne.s32.totalorder %s118, %s134
    %p136 = scmp.eq.s32.totalorder %s16, 0
    %p137 = por %p135, %p136
    %p138 = scmp.le.s32.totalorder 1, %s10
    %p139 = scmp.lt.s32.totalorder %s10, 3
    %p140 = pnand %p138, %p139
    %p141 = pneg %p140
    // Predicated region
    $region9: #{tpu_custom_call.1} parent=5 // pred_check
      _
    $region10: #{tpu_custom_call.1} parent=5 // pred_check_branch
      %143 = sbr.rel (%p140) target = $region12
    $region11: #{tpu_custom_call.1} parent=5 // pred_region
      %s144 = ssub.s32 %s10, 1
      // Predicated region
      $region13: #{tpu_custom_call.1} parent=11 // pred_check
        %p145 = pneg %p83
      $region14: #{tpu_custom_call.1} parent=11 // pred_check_branch
        %147 = sbr.rel (%p145) target = $region16
      $region15: #{tpu_custom_call.1} parent=11 // pred_region
        _
      $region16: #{tpu_custom_call.1} parent=11 // pred_fallthru
        _
      // Predicated region
      $region17: #{tpu_custom_call.1} parent=11 // pred_check
        %p148 = pneg %p104
      $region18: #{tpu_custom_call.1} parent=11 // pred_check_branch
        %150 = sbr.rel (%p148) target = $region20
      $region19: #{tpu_custom_call.1} parent=11 // pred_region
        _
      $region20: #{tpu_custom_call.1} parent=11 // pred_fallthru
        _
    $region12: #{tpu_custom_call.1} parent=5 // pred_fallthru
      _
    %p151 = scmp.lt.s32.totalorder %s10, 2
    // Predicated region
    $region21: #{tpu_custom_call.1} parent=5 // pred_check
      %p152 = pneg %p151
    $region22: #{tpu_custom_call.1} parent=5 // pred_check_branch
      %154 = sbr.rel (%p152) target = $region24
    $region23: #{tpu_custom_call.1} parent=5 // pred_region
      // Predicated region
      $region25: #{tpu_custom_call.1} parent=23 // pred_check
        %p155 = pneg %p30
      $region26: #{tpu_custom_call.1} parent=23 // pred_check_branch
        %157 = sbr.rel (%p155) target = $region28
      $region27: #{tpu_custom_call.1} parent=23 // pred_region
        %p158 = scmp.lt.s32.totalorder %s10, 1
        %s159 = scalar_select %p158, %s10, 1
        %s160 = smul.addr %s159, 2
        %s161 = smul.addr %s160, 8
        %s162 = scalar_lea.vmem %s0, %s161
      $region28: #{tpu_custom_call.1} parent=23 // pred_fallthru
        _
      // Predicated region
      $region29: #{tpu_custom_call.1} parent=23 // pred_check
        %p163 = pneg %p56
      $region30: #{tpu_custom_call.1} parent=23 // pred_check_branch
        %165 = sbr.rel (%p163) target = $region32
      $region31: #{tpu_custom_call.1} parent=23 // pred_region
        %p166 = scmp.lt.s32.totalorder %s10, 1
        %s167 = scalar_select %p166, %s10, 1
        %s168 = smul.addr %s167, 2
        %s169 = smul.addr %s168, 8
        %s170 = scalar_lea.vmem %s1, %s169
      $region32: #{tpu_custom_call.1} parent=23 // pred_fallthru
        _
    $region24: #{tpu_custom_call.1} parent=5 // pred_fallthru
      _
    %p171 = scmp.le.s32.totalorder 1, %s10
    %p172 = scmp.lt.s32.totalorder %s10, 3
    %p173 = pnand %p171, %p172
    %p174 = pneg %p173
    // Predicated region
    $region33: #{tpu_custom_call.1} parent=5 // pred_check
      _
    $region34: #{tpu_custom_call.1} parent=5 // pred_check_branch
      %176 = sbr.rel (%p173) target = $region36
    $region35: #{tpu_custom_call.1} parent=5 // pred_region
      %s177 = ssub.s32 %s10, 1
      %p178 = scmp.lt.s32.totalorder %s15, 1
      %s179 = scalar_select %p178, %s15, 1
      %s180 = smul.addr %s179, 2
      %s181 = smul.addr %s180, 8
      %s182 = scalar_lea.vmem %s0, %s181
      %p183 = pneg %p36
      %p184 = pneg %p33
      %p185 = scmp.lt.s32.totalorder %s15, 1
      %s186 = scalar_select %p185, %s15, 1
      %s187 = smul.addr %s186, 2
      %s188 = smul.addr %s187, 8
      %s189 = scalar_lea.vmem %s1, %s188
      %p190 = pneg %p62
      %p191 = pneg %p59
      %p192 = pneg %p83
      %p193 = pneg %p80
      %p194 = pneg %p104
      %p195 = pneg %p101
      %p196 = pneg %p130
      %p197 = pneg %p127
      %p198 = scmp.lt.s32.totalorder %s15, 1
      %s199 = scalar_select %p198, %s15, 1
      %s200 = scalar_lea.vmem %s4, %s199
      %p201 = scmp.lt.s32.totalorder %s15, 1
      %s202 = scalar_select %p201, %s15, 1
      %s203 = smul.addr %s202, 2
      %s204 = smul.addr %s203, 8
      %s205 = scalar_lea.vmem %s0, %s204
      %p206 = scmp.lt.s32.totalorder %s15, 1
      %s207 = scalar_select %p206, %s15, 1
      %s208 = smul.addr %s207, 2
      %s209 = smul.addr %s208, 8
      %s210 = scalar_lea.vmem %s1, %s209
      %p211 = scmp.lt.s32.totalorder %s15, 1
      %s212 = scalar_select %p211, %s15, 1
      %s213 = scalar_lea.vmem %s4, %s212
      %v214 = vld [vmem:[%s205] sm:$0xff]
      %v215 = vld [vmem:[%s205 + $0x8] sm:$0xff]
      %v216 = vld [vmem:[%s210] sm:$0xff]
      %v217 = vld [vmem:[%s210 + $0x8] sm:$0xff]
      %v218 = vld [vmem:[%s2] sm:$0xff]
      %v219 = vld [vmem:[%s2 + $0x8] sm:$0x1]
      %v220 = vld [vmem:[%s3] sm:$0xff]
      %v221 = vld [vmem:[%s3 + $0x8] sm:$0xff]
      %v222 = vld [vmem:[%s3 + $0x10] sm:$0xff]
      %v223 = vld [vmem:[%s3 + $0x18] sm:$0xff]
      %v224 = vld [vmem:[%s3 + $0x20] sm:$0xff]
      %v225 = vld [vmem:[%s3 + $0x28] sm:$0xff]
      %v226 = vld [vmem:[%s3 + $0x30] sm:$0xff]
      %v227 = vld [vmem:[%s3 + $0x38] sm:$0xff]
      %vm228 = vcmask 130048
      %v230 = vsel %vm228, %v218, 0
      %v233 = vsel %vm228, %v219, 0
      %235 = vmatprep.subr.mxu0 0.0
      %236 = vmatpush1.msra.mxu0 %v214
      %237 = vmatprep.subr.mxu0 0.0
      %238 = vmatpush1.msra.mxu0 %v215
      %239 = vmatprep.subr.mxu0 0.0
      %240 = vmatpush1.msra.mxu0 0.0
      %241 = vmatprep.subr.mxu0 0.0
      %242 = vmatpush1.msra.mxu0 0.0
      %243 = vmatprep.subr.mxu0 0.0
      %244 = vmatpush1.msra.mxu0 0.0
      %245 = vmatprep.subr.mxu0 0.0
      %246 = vmatpush1.msra.mxu0 0.0
      %247 = vmatprep.subr.mxu0 0.0
      %248 = vmatpush1.msra.mxu0 0.0
      %249 = vmatprep.subr.mxu0 0.0
      %250 = vmatpush1.msra.mxu0 0.0
      %251 = vmatprep.subr.mxu0 0.0
      %252 = vmatpush1.msra.mxu0 0.0
      %253 = vmatprep.subr.mxu0 0.0
      %254 = vmatpush1.msra.mxu0 0.0
      %255 = vmatprep.subr.mxu0 0.0
      %256 = vmatpush1.msra.mxu0 0.0
      %257 = vmatprep.subr.mxu0 0.0
      %258 = vmatpush1.msra.mxu0 0.0
      %259 = vmatprep.subr.mxu0 0.0
      %260 = vmatpush1.msra.mxu0 0.0
      %261 = vmatprep.subr.mxu0 0.0
      %262 = vmatpush1.msra.mxu0 0.0
      %263 = vmatprep.subr.mxu0 0.0
      %264 = vmatpush1.msra.mxu0 0.0
      %265 = vmatprep.subr.mxu0 0.0
      %266 = vmatpush1.msra.mxu0 0.0
      %267 = vmatprep.subr.mxu0 0.0
      %268 = vmatpush1.msra.mxu0 0.0
      %269 = vmatprep.subr.mxu0 0.0
      %270 = vmatpush1.msra.mxu0 0.0
      %271 = vmatprep.subr.mxu0 0.0
      %272 = vmatpush1.msra.mxu0 0.0
      %273 = vmatprep.subr.mxu0 0.0
      %274 = vmatpush1.msra.mxu0 0.0
      %275 = vmatprep.subr.mxu0 0.0
      %276 = vmatpush1.msra.mxu0 0.0
      %277 = vmatprep.subr.mxu0 0.0
      %278 = vmatpush1.msra.mxu0 0.0
      %279 = vmatprep.subr.mxu0 0.0
      %280 = vmatpush1.msra.mxu0 0.0
      %281 = vmatprep.subr.mxu0 0.0
      %282 = vmatpush1.msra.mxu0 0.0
      %283 = vmatprep.subr.mxu0 0.0
      %284 = vmatpush1.msra.mxu0 0.0
      %285 = vmatprep.subr.mxu0 0.0
      %286 = vmatpush1.msra.mxu0 0.0
      %287 = vmatprep.subr.mxu0 0.0
      %288 = vmatpush1.msra.mxu0 0.0
      %289 = vmatprep.subr.mxu0 0.0
      %290 = vmatpush1.msra.mxu0 0.0
      %291 = vmatprep.subr.mxu0 0.0
      %292 = vmatpush1.msra.mxu0 0.0
      %293 = vmatprep.subr.mxu0 0.0
      %294 = vmatpush1.msra.mxu0 0.0
      %295 = vmatprep.subr.mxu0 0.0
      %296 = vmatpush1.msra.mxu0 0.0
      %297 = vmatprep.subr.mxu0 0.0
      %298 = vmatpush1.msra.mxu0 0.0
      %299 = vmatprep.mubr.f32.mxu0 0.0
      %300 = vmatmul.mubr.f32.gmra.mrb[0].mxu0 %v230
      %v301 = vpop.f32.mrb[0].mxu0
      %v302 = vadd.f32 0.0, %v301
      %v303 = vpop.f32.mrb[0].mxu0
      %304 = vmatprep.mubr.f32.mxu0 0.0
      %305 = vmatmul.mubr.f32.gmra.mrb[0].mxu0 %v233
      %v306 = vpop.f32.mrb[0].mxu0
      %v307 = vadd.f32 0.0, %v306
      %v308 = vpop.f32.mrb[0].mxu0
      %309 = vdwg.mxu0
      %vm310 = vcmask 523264
      %v312 = vsel %vm310, %v302, 0
      %v315 = vsel %vm310, %v307, 0
      %317 = vmatprep.subr.mxu0 0.0
      %318 = vmatpush1.msra.mxu0 %v220
      %319 = vmatprep.subr.mxu0 0.0
      %320 = vmatpush1.msra.mxu0 %v221
      %321 = vmatprep.subr.mxu0 0.0
      %322 = vmatpush1.msra.mxu0 %v222
      %323 = vmatprep.subr.mxu0 0.0
      %324 = vmatpush1.msra.mxu0 %v223
      %325 = vmatprep.subr.mxu0 0.0
      %326 = vmatpush1.msra.mxu0 %v224
      %327 = vmatprep.subr.mxu0 0.0
      %328 = vmatpush1.msra.mxu0 %v225
      %329 = vmatprep.subr.mxu0 0.0
      %330 = vmatpush1.msra.mxu0 %v226
      %331 = vmatprep.subr.mxu0 0.0
      %332 = vmatpush1.msra.mxu0 %v227
      %333 = vmatprep.subr.mxu0 0.0
      %334 = vmatpush1.msra.mxu0 0.0
      %335 = vmatprep.subr.mxu0 0.0
      %336 = vmatpush1.msra.mxu0 0.0
      %337 = vmatprep.subr.mxu0 0.0
      %338 = vmatpush1.msra.mxu0 0.0
      %339 = vmatprep.subr.mxu0 0.0
      %340 = vmatpush1.msra.mxu0 0.0
      %341 = vmatprep.subr.mxu0 0.0
      %342 = vmatpush1.msra.mxu0 0.0
      %343 = vmatprep.subr.mxu0 0.0
      %344 = vmatpush1.msra.mxu0 0.0
      %345 = vmatprep.subr.mxu0 0.0
      %346 = vmatpush1.msra.mxu0 0.0
      %347 = vmatprep.subr.mxu0 0.0
      %348 = vmatpush1.msra.mxu0 0.0
      %349 = vmatprep.subr.mxu0 0.0
      %350 = vmatpush1.msra.mxu0 0.0
      %351 = vmatprep.subr.mxu0 0.0
      %352 = vmatpush1.msra.mxu0 0.0
      %353 = vmatprep.subr.mxu0 0.0
      %354 = vmatpush1.msra.mxu0 0.0
      %355 = vmatprep.subr.mxu0 0.0
      %356 = vmatpush1.msra.mxu0 0.0
      %357 = vmatprep.subr.mxu0 0.0
      %358 = vmatpush1.msra.mxu0 0.0
      %359 = vmatprep.subr.mxu0 0.0
      %360 = vmatpush1.msra.mxu0 0.0
      %361 = vmatprep.subr.mxu0 0.0
      %362 = vmatpush1.msra.mxu0 0.0
      %363 = vmatprep.subr.mxu0 0.0
      %364 = vmatpush1.msra.mxu0 0.0
      %365 = vmatprep.subr.mxu0 0.0
      %366 = vmatpush1.msra.mxu0 0.0
      %367 = vmatprep.subr.mxu0 0.0
      %368 = vmatpush1.msra.mxu0 0.0
      %369 = vmatprep.subr.mxu0 0.0
      %370 = vmatpush1.msra.mxu0 0.0
      %371 = vmatprep.subr.mxu0 0.0
      %372 = vmatpush1.msra.mxu0 0.0
      %373 = vmatprep.subr.mxu0 0.0
      %374 = vmatpush1.msra.mxu0 0.0
      %375 = vmatprep.subr.mxu0 0.0
      %376 = vmatpush1.msra.mxu0 0.0
      %377 = vmatprep.subr.mxu0 0.0
      %378 = vmatpush1.msra.mxu0 0.0
      %379 = vmatprep.subr.mxu0 0.0
      %380 = vmatpush1.msra.mxu0 0.0
      %381 = vmatprep.mubr.f32.mxu0 0.0
      %382 = vmatmul.mubr.f32.gmra.mrb[0].mxu0 %v312
      %v383 = vpop.f32.mrb[0].mxu0
      %v384 = vadd.f32 0.0, %v383
      %v385 = vpop.f32.mrb[0].mxu0
      %386 = vmatprep.mubr.f32.mxu0 0.0
      %387 = vmatmul.mubr.f32.gmra.mrb[0].mxu0 %v315
      %v388 = vpop.f32.mrb[0].mxu0
      %v389 = vadd.f32 0.0, %v388
      %v390 = vpop.f32.mrb[0].mxu0
      %391 = vdwg.mxu0
      %392 = vmatprep.subr.mxu0 0.0
      %393 = vmatpush1.msra.mxu0 %v216
      %394 = vmatprep.subr.mxu0 0.0
      %395 = vmatpush1.msra.mxu0 %v217
      %396 = vmatprep.subr.mxu0 0.0
      %397 = vmatpush1.msra.mxu0 0.0
      %398 = vmatprep.subr.mxu0 0.0
      %399 = vmatpush1.msra.mxu0 0.0
      %400 = vmatprep.subr.mxu0 0.0
      %401 = vmatpush1.msra.mxu0 0.0
      %402 = vmatprep.subr.mxu0 0.0
      %403 = vmatpush1.msra.mxu0 0.0
      %404 = vmatprep.subr.mxu0 0.0
      %405 = vmatpush1.msra.mxu0 0.0
      %406 = vmatprep.subr.mxu0 0.0
      %407 = vmatpush1.msra.mxu0 0.0
      %408 = vmatprep.subr.mxu0 0.0
      %409 = vmatpush1.msra.mxu0 0.0
      %410 = vmatprep.subr.mxu0 0.0
      %411 = vmatpush1.msra.mxu0 0.0
      %412 = vmatprep.subr.mxu0 0.0
      %413 = vmatpush1.msra.mxu0 0.0
      %414 = vmatprep.subr.mxu0 0.0
      %415 = vmatpush1.msra.mxu0 0.0
      %416 = vmatprep.subr.mxu0 0.0
      %417 = vmatpush1.msra.mxu0 0.0
      %418 = vmatprep.subr.mxu0 0.0
      %419 = vmatpush1.msra.mxu0 0.0
      %420 = vmatprep.subr.mxu0 0.0
      %421 = vmatpush1.msra.mxu0 0.0
      %422 = vmatprep.subr.mxu0 0.0
      %423 = vmatpush1.msra.mxu0 0.0
      %424 = vmatprep.subr.mxu0 0.0
      %425 = vmatpush1.msra.mxu0 0.0
      %426 = vmatprep.subr.mxu0 0.0
      %427 = vmatpush1.msra.mxu0 0.0
      %428 = vmatprep.subr.mxu0 0.0
      %429 = vmatpush1.msra.mxu0 0.0
      %430 = vmatprep.subr.mxu0 0.0
      %431 = vmatpush1.msra.mxu0 0.0
      %432 = vmatprep.subr.mxu0 0.0
      %433 = vmatpush1.msra.mxu0 0.0
      %434 = vmatprep.subr.mxu0 0.0
      %435 = vmatpush1.msra.mxu0 0.0
      %436 = vmatprep.subr.mxu0 0.0
      %437 = vmatpush1.msra.mxu0 0.0
      %438 = vmatprep.subr.mxu0 0.0
      %439 = vmatpush1.msra.mxu0 0.0
      %440 = vmatprep.subr.mxu0 0.0
      %441 = vmatpush1.msra.mxu0 0.0
      %442 = vmatprep.subr.mxu0 0.0
      %443 = vmatpush1.msra.mxu0 0.0
      %444 = vmatprep.subr.mxu0 0.0
      %445 = vmatpush1.msra.mxu0 0.0
      %446 = vmatprep.subr.mxu0 0.0
      %447 = vmatpush1.msra.mxu0 0.0
      %448 = vmatprep.subr.mxu0 0.0
      %449 = vmatpush1.msra.mxu0 0.0
      %450 = vmatprep.subr.mxu0 0.0
      %451 = vmatpush1.msra.mxu0 0.0
      %452 = vmatprep.subr.mxu0 0.0
      %453 = vmatpush1.msra.mxu0 0.0
      %454 = vmatprep.subr.mxu0 0.0
      %455 = vmatpush1.msra.mxu0 0.0
      %456 = vmatprep.mubr.f32.mxu0 0.0
      %457 = vmatmul.mubr.f32.gmra.mrb[0].mxu0 %v230
      %v458 = vpop.f32.mrb[0].mxu0
      %v459 = vadd.f32 0.0, %v458
      %v460 = vpop.f32.mrb[0].mxu0
      %461 = vmatprep.mubr.f32.mxu0 0.0
      %462 = vmatmul.mubr.f32.gmra.mrb[0].mxu0 %v233
      %v463 = vpop.f32.mrb[0].mxu0
      %v464 = vadd.f32 0.0, %v463
      %v465 = vpop.f32.mrb[0].mxu0
      %466 = vdwg.mxu0
      %v468 = vsel %vm310, %v459, 0
      %v471 = vsel %vm310, %v464, 0
      %473 = vmatprep.subr.mxu0 0.0
      %474 = vmatpush1.msra.mxu0 %v220
      %475 = vmatprep.subr.mxu0 0.0
      %476 = vmatpush1.msra.mxu0 %v221
      %477 = vmatprep.subr.mxu0 0.0
      %478 = vmatpush1.msra.mxu0 %v222
      %479 = vmatprep.subr.mxu0 0.0
      %480 = vmatpush1.msra.mxu0 %v223
      %481 = vmatprep.subr.mxu0 0.0
      %482 = vmatpush1.msra.mxu0 %v224
      %483 = vmatprep.subr.mxu0 0.0
      %484 = vmatpush1.msra.mxu0 %v225
      %485 = vmatprep.subr.mxu0 0.0
      %486 = vmatpush1.msra.mxu0 %v226
      %487 = vmatprep.subr.mxu0 0.0
      %488 = vmatpush1.msra.mxu0 %v227
      %489 = vmatprep.subr.mxu0 0.0
      %490 = vmatpush1.msra.mxu0 0.0
      %491 = vmatprep.subr.mxu0 0.0
      %492 = vmatpush1.msra.mxu0 0.0
      %493 = vmatprep.subr.mxu0 0.0
      %494 = vmatpush1.msra.mxu0 0.0
      %495 = vmatprep.subr.mxu0 0.0
      %496 = vmatpush1.msra.mxu0 0.0
      %497 = vmatprep.subr.mxu0 0.0
      %498 = vmatpush1.msra.mxu0 0.0
      %499 = vmatprep.subr.mxu0 0.0
      %500 = vmatpush1.msra.mxu0 0.0
      %501 = vmatprep.subr.mxu0 0.0
      %502 = vmatpush1.msra.mxu0 0.0
      %503 = vmatprep.subr.mxu0 0.0
      %504 = vmatpush1.msra.mxu0 0.0
      %505 = vmatprep.subr.mxu0 0.0
      %506 = vmatpush1.msra.mxu0 0.0
      %507 = vmatprep.subr.mxu0 0.0
      %508 = vmatpush1.msra.mxu0 0.0
      %509 = vmatprep.subr.mxu0 0.0
      %510 = vmatpush1.msra.mxu0 0.0
      %511 = vmatprep.subr.mxu0 0.0
      %512 = vmatpush1.msra.mxu0 0.0
      %513 = vmatprep.subr.mxu0 0.0
      %514 = vmatpush1.msra.mxu0 0.0
      %515 = vmatprep.subr.mxu0 0.0
      %516 = vmatpush1.msra.mxu0 0.0
      %517 = vmatprep.subr.mxu0 0.0
      %518 = vmatpush1.msra.mxu0 0.0
      %519 = vmatprep.subr.mxu0 0.0
      %520 = vmatpush1.msra.mxu0 0.0
      %521 = vmatprep.subr.mxu0 0.0
      %522 = vmatpush1.msra.mxu0 0.0
      %523 = vmatprep.subr.mxu0 0.0
      %524 = vmatpush1.msra.mxu0 0.0
      %525 = vmatprep.subr.mxu0 0.0
      %526 = vmatpush1.msra.mxu0 0.0
      %527 = vmatprep.subr.mxu0 0.0
      %528 = vmatpush1.msra.mxu0 0.0
      %529 = vmatprep.subr.mxu0 0.0
      %530 = vmatpush1.msra.mxu0 0.0
      %531 = vmatprep.subr.mxu0 0.0
      %532 = vmatpush1.msra.mxu0 0.0
      %533 = vmatprep.subr.mxu0 0.0
      %534 = vmatpush1.msra.mxu0 0.0
      %535 = vmatprep.subr.mxu0 0.0
      %536 = vmatpush1.msra.mxu0 0.0
      %537 = vmatprep.mubr.f32.mxu0 0.0
      %538 = vmatmul.mubr.f32.gmra.mrb[0].mxu0 %v468
      %v539 = vpop.f32.mrb[0].mxu0
      %v540 = vadd.f32 0.0, %v539
      %v541 = vpop.f32.mrb[0].mxu0
      %542 = vmatprep.mubr.f32.mxu0 0.0
      %543 = vmatmul.mubr.f32.gmra.mrb[0].mxu0 %v471
      %v544 = vpop.f32.mrb[0].mxu0
      %v545 = vadd.f32 0.0, %v544
      %v546 = vpop.f32.mrb[0].mxu0
      %547 = vdwg.mxu0
      %v548 = vmul.f32 %v214, %v214
      %v549 = vmul.f32 %v215, %v215
      %550 = vmatprep.subr.mxu0 0.0
      %551 = vmatpush1.msra.mxu0 %v548
      %552 = vmatprep.subr.mxu0 0.0
      %553 = vmatpush1.msra.mxu0 %v549
      %554 = vmatprep.subr.mxu0 0.0
      %555 = vmatpush1.msra.mxu0 0.0
      %556 = vmatprep.subr.mxu0 0.0
      %557 = vmatpush1.msra.mxu0 0.0
      %558 = vmatprep.subr.mxu0 0.0
      %559 = vmatpush1.msra.mxu0 0.0
      %560 = vmatprep.subr.mxu0 0.0
      %561 = vmatpush1.msra.mxu0 0.0
      %562 = vmatprep.subr.mxu0 0.0
      %563 = vmatpush1.msra.mxu0 0.0
      %564 = vmatprep.subr.mxu0 0.0
      %565 = vmatpush1.msra.mxu0 0.0
      %566 = vmatprep.subr.mxu0 0.0
      %567 = vmatpush1.msra.mxu0 0.0
      %568 = vmatprep.subr.mxu0 0.0
      %569 = vmatpush1.msra.mxu0 0.0
      %570 = vmatprep.subr.mxu0 0.0
      %571 = vmatpush1.msra.mxu0 0.0
      %572 = vmatprep.subr.mxu0 0.0
      %573 = vmatpush1.msra.mxu0 0.0
      %574 = vmatprep.subr.mxu0 0.0
      %575 = vmatpush1.msra.mxu0 0.0
      %576 = vmatprep.subr.mxu0 0.0
      %577 = vmatpush1.msra.mxu0 0.0
      %578 = vmatprep.subr.mxu0 0.0
      %579 = vmatpush1.msra.mxu0 0.0
      %580 = vmatprep.subr.mxu0 0.0
      %581 = vmatpush1.msra.mxu0 0.0
      %582 = vmatprep.subr.mxu0 0.0
      %583 = vmatpush1.msra.mxu0 0.0
      %584 = vmatprep.subr.mxu0 0.0
      %585 = vmatpush1.msra.mxu0 0.0
      %586 = vmatprep.subr.mxu0 0.0
      %587 = vmatpush1.msra.mxu0 0.0
      %588 = vmatprep.subr.mxu0 0.0
      %589 = vmatpush1.msra.mxu0 0.0
      %590 = vmatprep.subr.mxu0 0.0
      %591 = vmatpush1.msra.mxu0 0.0
      %592 = vmatprep.subr.mxu0 0.0
      %593 = vmatpush1.msra.mxu0 0.0
      %594 = vmatprep.subr.mxu0 0.0
      %595 = vmatpush1.msra.mxu0 0.0
      %596 = vmatprep.subr.mxu0 0.0
      %597 = vmatpush1.msra.mxu0 0.0
      %598 = vmatprep.subr.mxu0 0.0
      %599 = vmatpush1.msra.mxu0 0.0
      %600 = vmatprep.subr.mxu0 0.0
      %601 = vmatpush1.msra.mxu0 0.0
      %602 = vmatprep.subr.mxu0 0.0
      %603 = vmatpush1.msra.mxu0 0.0
      %604 = vmatprep.subr.mxu0 0.0
      %605 = vmatpush1.msra.mxu0 0.0
      %606 = vmatprep.subr.mxu0 0.0
      %607 = vmatpush1.msra.mxu0 0.0
      %608 = vmatprep.subr.mxu0 0.0
      %609 = vmatpush1.msra.mxu0 0.0
      %610 = vmatprep.subr.mxu0 0.0
      %611 = vmatpush1.msra.mxu0 0.0
      %612 = vmatprep.subr.mxu0 0.0
      %613 = vmatpush1.msra.mxu0 0.0
      %614 = vmatprep.mubr.f32.mxu0 0.0
      %615 = vmatmul.mubr.f32.gmra.mrb[0].mxu0 %v230
      %v616 = vpop.f32.mrb[0].mxu0
      %v617 = vadd.f32 0.0, %v616
      %v618 = vpop.f32.mrb[0].mxu0
      %619 = vmatprep.mubr.f32.mxu0 0.0
      %620 = vmatmul.mubr.f32.gmra.mrb[0].mxu0 %v233
      %v621 = vpop.f32.mrb[0].mxu0
      %v622 = vadd.f32 0.0, %v621
      %v623 = vpop.f32.mrb[0].mxu0
      %624 = vdwg.mxu0
      %v625 = vmul.f32 %v216, %v216
      %v626 = vmul.f32 %v217, %v217
      %627 = vmatprep.subr.mxu0 0.0
      %628 = vmatpush1.msra.mxu0 %v625
      %629 = vmatprep.subr.mxu0 0.0
      %630 = vmatpush1.msra.mxu0 %v626
      %631 = vmatprep.subr.mxu0 0.0
      %632 = vmatpush1.msra.mxu0 0.0
      %633 = vmatprep.subr.mxu0 0.0
      %634 = vmatpush1.msra.mxu0 0.0
      %635 = vmatprep.subr.mxu0 0.0
      %636 = vmatpush1.msra.mxu0 0.0
      %637 = vmatprep.subr.mxu0 0.0
      %638 = vmatpush1.msra.mxu0 0.0
      %639 = vmatprep.subr.mxu0 0.0
      %640 = vmatpush1.msra.mxu0 0.0
      %641 = vmatprep.subr.mxu0 0.0
      %642 = vmatpush1.msra.mxu0 0.0
      %643 = vmatprep.subr.mxu0 0.0
      %644 = vmatpush1.msra.mxu0 0.0
      %645 = vmatprep.subr.mxu0 0.0
      %646 = vmatpush1.msra.mxu0 0.0
      %647 = vmatprep.subr.mxu0 0.0
      %648 = vmatpush1.msra.mxu0 0.0
      %649 = vmatprep.subr.mxu0 0.0
      %650 = vmatpush1.msra.mxu0 0.0
      %651 = vmatprep.subr.mxu0 0.0
      %652 = vmatpush1.msra.mxu0 0.0
      %653 = vmatprep.subr.mxu0 0.0
      %654 = vmatpush1.msra.mxu0 0.0
      %655 = vmatprep.subr.mxu0 0.0
      %656 = vmatpush1.msra.mxu0 0.0
      %657 = vmatprep.subr.mxu0 0.0
      %658 = vmatpush1.msra.mxu0 0.0
      %659 = vmatprep.subr.mxu0 0.0
      %660 = vmatpush1.msra.mxu0 0.0
      %661 = vmatprep.subr.mxu0 0.0
      %662 = vmatpush1.msra.mxu0 0.0
      %663 = vmatprep.subr.mxu0 0.0
      %664 = vmatpush1.msra.mxu0 0.0
      %665 = vmatprep.subr.mxu0 0.0
      %666 = vmatpush1.msra.mxu0 0.0
      %667 = vmatprep.subr.mxu0 0.0
      %668 = vmatpush1.msra.mxu0 0.0
      %669 = vmatprep.subr.mxu0 0.0
      %670 = vmatpush1.msra.mxu0 0.0
      %671 = vmatprep.subr.mxu0 0.0
      %672 = vmatpush1.msra.mxu0 0.0
      %673 = vmatprep.subr.mxu0 0.0
      %674 = vmatpush1.msra.mxu0 0.0
      %675 = vmatprep.subr.mxu0 0.0
      %676 = vmatpush1.msra.mxu0 0.0
      %677 = vmatprep.subr.mxu0 0.0
      %678 = vmatpush1.msra.mxu0 0.0
      %679 = vmatprep.subr.mxu0 0.0
      %680 = vmatpush1.msra.mxu0 0.0
      %681 = vmatprep.subr.mxu0 0.0
      %682 = vmatpush1.msra.mxu0 0.0
      %683 = vmatprep.subr.mxu0 0.0
      %684 = vmatpush1.msra.mxu0 0.0
      %685 = vmatprep.subr.mxu0 0.0
      %686 = vmatpush1.msra.mxu0 0.0
      %687 = vmatprep.subr.mxu0 0.0
      %688 = vmatpush1.msra.mxu0 0.0
      %689 = vmatprep.subr.mxu0 0.0
      %690 = vmatpush1.msra.mxu0 0.0
      %691 = vmatprep.mubr.f32.mxu0 0.0
      %692 = vmatmul.mubr.f32.gmra.mrb[0].mxu0 %v230
      %v693 = vpop.f32.mrb[0].mxu0
      %v694 = vadd.f32 0.0, %v693
      %v695 = vpop.f32.mrb[0].mxu0
      %696 = vmatprep.mubr.f32.mxu0 0.0
      %697 = vmatmul.mubr.f32.gmra.mrb[0].mxu0 %v233
      %v698 = vpop.f32.mrb[0].mxu0
      %v699 = vadd.f32 0.0, %v698
      %v700 = vpop.f32.mrb[0].mxu0
      %701 = vdwg.mxu0
      %v703 = vsel %vm310, %v694, 0
      %v706 = vsel %vm310, %v699, 0
      %708 = vmatprep.subr.mxu0 0.0
      %709 = vmatpush1.msra.mxu0 %v220
      %710 = vmatprep.subr.mxu0 0.0
      %711 = vmatpush1.msra.mxu0 %v221
      %712 = vmatprep.subr.mxu0 0.0
      %713 = vmatpush1.msra.mxu0 %v222
      %714 = vmatprep.subr.mxu0 0.0
      %715 = vmatpush1.msra.mxu0 %v223
      %716 = vmatprep.subr.mxu0 0.0
      %717 = vmatpush1.msra.mxu0 %v224
      %718 = vmatprep.subr.mxu0 0.0
      %719 = vmatpush1.msra.mxu0 %v225
      %720 = vmatprep.subr.mxu0 0.0
      %721 = vmatpush1.msra.mxu0 %v226
      %722 = vmatprep.subr.mxu0 0.0
      %723 = vmatpush1.msra.mxu0 %v227
      %724 = vmatprep.subr.mxu0 0.0
      %725 = vmatpush1.msra.mxu0 0.0
      %726 = vmatprep.subr.mxu0 0.0
      %727 = vmatpush1.msra.mxu0 0.0
      %728 = vmatprep.subr.mxu0 0.0
      %729 = vmatpush1.msra.mxu0 0.0
      %730 = vmatprep.subr.mxu0 0.0
      %731 = vmatpush1.msra.mxu0 0.0
      %732 = vmatprep.subr.mxu0 0.0
      %733 = vmatpush1.msra.mxu0 0.0
      %734 = vmatprep.subr.mxu0 0.0
      %735 = vmatpush1.msra.mxu0 0.0
      %736 = vmatprep.subr.mxu0 0.0
      %737 = vmatpush1.msra.mxu0 0.0
      %738 = vmatprep.subr.mxu0 0.0
      %739 = vmatpush1.msra.mxu0 0.0
      %740 = vmatprep.subr.mxu0 0.0
      %741 = vmatpush1.msra.mxu0 0.0
      %742 = vmatprep.subr.mxu0 0.0
      %743 = vmatpush1.msra.mxu0 0.0
      %744 = vmatprep.subr.mxu0 0.0
      %745 = vmatpush1.msra.mxu0 0.0
      %746 = vmatprep.subr.mxu0 0.0
      %747 = vmatpush1.msra.mxu0 0.0
      %748 = vmatprep.subr.mxu0 0.0
      %749 = vmatpush1.msra.mxu0 0.0
      %750 = vmatprep.subr.mxu0 0.0
      %751 = vmatpush1.msra.mxu0 0.0
      %752 = vmatprep.subr.mxu0 0.0
      %753 = vmatpush1.msra.mxu0 0.0
      %754 = vmatprep.subr.mxu0 0.0
      %755 = vmatpush1.msra.mxu0 0.0
      %756 = vmatprep.subr.mxu0 0.0
      %757 = vmatpush1.msra.mxu0 0.0
      %758 = vmatprep.subr.mxu0 0.0
      %759 = vmatpush1.msra.mxu0 0.0
      %760 = vmatprep.subr.mxu0 0.0
      %761 = vmatpush1.msra.mxu0 0.0
      %762 = vmatprep.subr.mxu0 0.0
      %763 = vmatpush1.msra.mxu0 0.0
      %764 = vmatprep.subr.mxu0 0.0
      %765 = vmatpush1.msra.mxu0 0.0
      %766 = vmatprep.subr.mxu0 0.0
      %767 = vmatpush1.msra.mxu0 0.0
      %768 = vmatprep.subr.mxu0 0.0
      %769 = vmatpush1.msra.mxu0 0.0
      %770 = vmatprep.subr.mxu0 0.0
      %771 = vmatpush1.msra.mxu0 0.0
      %772 = vmatprep.mubr.f32.mxu0 0.0
      %773 = vmatmul.mubr.f32.gmra.mrb[0].mxu0 %v703
      %v774 = vpop.f32.mrb[0].mxu0
      %v775 = vadd.f32 0.0, %v774
      %v776 = vpop.f32.mrb[0].mxu0
      %777 = vmatprep.mubr.f32.mxu0 0.0
      %778 = vmatmul.mubr.f32.gmra.mrb[0].mxu0 %v706
      %v779 = vpop.f32.mrb[0].mxu0
      %v780 = vadd.f32 0.0, %v779
      %v781 = vpop.f32.mrb[0].mxu0
      %782 = vdwg.mxu0
      %v783 = vmul.f32 %v214, %v216
      %v784 = vmul.f32 %v215, %v217
      %785 = vmatprep.subr.mxu0 0.0
      %786 = vmatpush1.msra.mxu0 %v783
      %787 = vmatprep.subr.mxu0 0.0
      %788 = vmatpush1.msra.mxu0 %v784
      %789 = vmatprep.subr.mxu0 0.0
      %790 = vmatpush1.msra.mxu0 0.0
      %791 = vmatprep.subr.mxu0 0.0
      %792 = vmatpush1.msra.mxu0 0.0
      %793 = vmatprep.subr.mxu0 0.0
      %794 = vmatpush1.msra.mxu0 0.0
      %795 = vmatprep.subr.mxu0 0.0
      %796 = vmatpush1.msra.mxu0 0.0
      %797 = vmatprep.subr.mxu0 0.0
      %798 = vmatpush1.msra.mxu0 0.0
      %799 = vmatprep.subr.mxu0 0.0
      %800 = vmatpush1.msra.mxu0 0.0
      %801 = vmatprep.subr.mxu0 0.0
      %802 = vmatpush1.msra.mxu0 0.0
      %803 = vmatprep.subr.mxu0 0.0
      %804 = vmatpush1.msra.mxu0 0.0
      %805 = vmatprep.subr.mxu0 0.0
      %806 = vmatpush1.msra.mxu0 0.0
      %807 = vmatprep.subr.mxu0 0.0
      %808 = vmatpush1.msra.mxu0 0.0
      %809 = vmatprep.subr.mxu0 0.0
      %810 = vmatpush1.msra.mxu0 0.0
      %811 = vmatprep.subr.mxu0 0.0
      %812 = vmatpush1.msra.mxu0 0.0
      %813 = vmatprep.subr.mxu0 0.0
      %814 = vmatpush1.msra.mxu0 0.0
      %815 = vmatprep.subr.mxu0 0.0
      %816 = vmatpush1.msra.mxu0 0.0
      %817 = vmatprep.subr.mxu0 0.0
      %818 = vmatpush1.msra.mxu0 0.0
      %819 = vmatprep.subr.mxu0 0.0
      %820 = vmatpush1.msra.mxu0 0.0
      %821 = vmatprep.subr.mxu0 0.0
      %822 = vmatpush1.msra.mxu0 0.0
      %823 = vmatprep.subr.mxu0 0.0
      %824 = vmatpush1.msra.mxu0 0.0
      %825 = vmatprep.subr.mxu0 0.0
      %826 = vmatpush1.msra.mxu0 0.0
      %827 = vmatprep.subr.mxu0 0.0
      %828 = vmatpush1.msra.mxu0 0.0
      %829 = vmatprep.subr.mxu0 0.0
      %830 = vmatpush1.msra.mxu0 0.0
      %831 = vmatprep.subr.mxu0 0.0
      %832 = vmatpush1.msra.mxu0 0.0
      %833 = vmatprep.subr.mxu0 0.0
      %834 = vmatpush1.msra.mxu0 0.0
      %835 = vmatprep.subr.mxu0 0.0
      %836 = vmatpush1.msra.mxu0 0.0
      %837 = vmatprep.subr.mxu0 0.0
      %838 = vmatpush1.msra.mxu0 0.0
      %839 = vmatprep.subr.mxu0 0.0
      %840 = vmatpush1.msra.mxu0 0.0
      %841 = vmatprep.subr.mxu0 0.0
      %842 = vmatpush1.msra.mxu0 0.0
      %843 = vmatprep.subr.mxu0 0.0
      %844 = vmatpush1.msra.mxu0 0.0
      %845 = vmatprep.subr.mxu0 0.0
      %846 = vmatpush1.msra.mxu0 0.0
      %847 = vmatprep.subr.mxu0 0.0
      %848 = vmatpush1.msra.mxu0 0.0
      %849 = vmatprep.mubr.f32.mxu0 0.0
      %850 = vmatmul.mubr.f32.gmra.mrb[0].mxu0 %v230
      %v851 = vpop.f32.mrb[0].mxu0
      %v852 = vadd.f32 0.0, %v851
      %v853 = vpop.f32.mrb[0].mxu0
      %854 = vmatprep.mubr.f32.mxu0 0.0
      %855 = vmatmul.mubr.f32.gmra.mrb[0].mxu0 %v233
      %v856 = vpop.f32.mrb[0].mxu0
      %v857 = vadd.f32 0.0, %v856
      %v858 = vpop.f32.mrb[0].mxu0
      %859 = vdwg.mxu0
      %v861 = vsel %vm310, %v852, 0
      %v864 = vsel %vm310, %v857, 0
      %866 = vmatprep.subr.mxu0 0.0
      %867 = vmatpush1.msra.mxu0 %v220
      %868 = vmatprep.subr.mxu0 0.0
      %869 = vmatpush1.msra.mxu0 %v221
      %870 = vmatprep.subr.mxu0 0.0
      %871 = vmatpush1.msra.mxu0 %v222
      %872 = vmatprep.subr.mxu0 0.0
      %873 = vmatpush1.msra.mxu0 %v223
      %874 = vmatprep.subr.mxu0 0.0
      %875 = vmatpush1.msra.mxu0 %v224
      %876 = vmatprep.subr.mxu0 0.0
      %877 = vmatpush1.msra.mxu0 %v225
      %878 = vmatprep.subr.mxu0 0.0
      %879 = vmatpush1.msra.mxu0 %v226
      %880 = vmatprep.subr.mxu0 0.0
      %881 = vmatpush1.msra.mxu0 %v227
      %882 = vmatprep.subr.mxu0 0.0
      %883 = vmatpush1.msra.mxu0 0.0
      %884 = vmatprep.subr.mxu0 0.0
      %885 = vmatpush1.msra.mxu0 0.0
      %886 = vmatprep.subr.mxu0 0.0
      %887 = vmatpush1.msra.mxu0 0.0
      %888 = vmatprep.subr.mxu0 0.0
      %889 = vmatpush1.msra.mxu0 0.0
      %890 = vmatprep.subr.mxu0 0.0
      %891 = vmatpush1.msra.mxu0 0.0
      %892 = vmatprep.subr.mxu0 0.0
      %893 = vmatpush1.msra.mxu0 0.0
      %894 = vmatprep.subr.mxu0 0.0
      %895 = vmatpush1.msra.mxu0 0.0
      %896 = vmatprep.subr.mxu0 0.0
      %897 = vmatpush1.msra.mxu0 0.0
      %898 = vmatprep.subr.mxu0 0.0
      %899 = vmatpush1.msra.mxu0 0.0
      %900 = vmatprep.subr.mxu0 0.0
      %901 = vmatpush1.msra.mxu0 0.0
      %902 = vmatprep.subr.mxu0 0.0
      %903 = vmatpush1.msra.mxu0 0.0
      %904 = vmatprep.subr.mxu0 0.0
      %905 = vmatpush1.msra.mxu0 0.0
      %906 = vmatprep.subr.mxu0 0.0
      %907 = vmatpush1.msra.mxu0 0.0
      %908 = vmatprep.subr.mxu0 0.0
      %909 = vmatpush1.msra.mxu0 0.0
      %910 = vmatprep.subr.mxu0 0.0
      %911 = vmatpush1.msra.mxu0 0.0
      %912 = vmatprep.subr.mxu0 0.0
      %913 = vmatpush1.msra.mxu0 0.0
      %914 = vmatprep.subr.mxu0 0.0
      %915 = vmatpush1.msra.mxu0 0.0
      %916 = vmatprep.subr.mxu0 0.0
      %917 = vmatpush1.msra.mxu0 0.0
      %918 = vmatprep.subr.mxu0 0.0
      %919 = vmatpush1.msra.mxu0 0.0
      %920 = vmatprep.subr.mxu0 0.0
      %921 = vmatpush1.msra.mxu0 0.0
      %922 = vmatprep.subr.mxu0 0.0
      %923 = vmatpush1.msra.mxu0 0.0
      %924 = vmatprep.subr.mxu0 0.0
      %925 = vmatpush1.msra.mxu0 0.0
      %926 = vmatprep.subr.mxu0 0.0
      %927 = vmatpush1.msra.mxu0 0.0
      %928 = vmatprep.subr.mxu0 0.0
      %929 = vmatpush1.msra.mxu0 0.0
      %930 = vmatprep.mubr.f32.mxu0 0.0
      %931 = vmatmul.mubr.f32.gmra.mrb[0].mxu0 %v861
      %v932 = vpop.f32.mrb[0].mxu0
      %v933 = vadd.f32 0.0, %v932
      %v934 = vpop.f32.mrb[0].mxu0
      %935 = vmatprep.mubr.f32.mxu0 0.0
      %936 = vmatmul.mubr.f32.gmra.mrb[0].mxu0 %v864
      %v937 = vpop.f32.mrb[0].mxu0
      %v938 = vadd.f32 0.0, %v937
      %v939 = vpop.f32.mrb[0].mxu0
      %940 = vdwg.mxu0
      %v941 = vmul.f32 %v384, %v540
      %v942 = vmul.f32 %v389, %v545
      %v943 = vmul.f32 %v384, %v384
      %v944 = vmul.f32 %v389, %v389
      %v945 = vmul.f32 %v540, %v540
      %v946 = vmul.f32 %v545, %v545
      %v947 = vmul.f32 %v941, 2.0
      %v948 = vmul.f32 %v942, 2.0
      %v949 = vadd.f32 %v947, 0.4096
      %v950 = vadd.f32 %v948, 0.4096
      %v951 = vmul.f32 %v933, 64.0
      %v952 = vmul.f32 %v938, 64.0
      %v953 = vsub.f32 %v951, %v941
      %v954 = vsub.f32 %v952, %v942
      %v955 = vmul.f32 %v953, 2.0
      %v956 = vmul.f32 %v954, 2.0
      %v957 = vadd.f32 %v955, 3.6864
      %v958 = vadd.f32 %v956, 3.6864
      %v959 = vmul.f32 %v949, %v957
      %v960 = vmul.f32 %v950, %v958
      %v961 = vadd.f32 %v943, %v945
      %v962 = vadd.f32 %v944, %v946
      %v963 = vadd.f32 %v961, 0.4096
      %v964 = vadd.f32 %v962, 0.4096
      %v966 = vsel %vm310, %v617, 0
      %v969 = vsel %vm310, %v622, 0
      %971 = vmatprep.subr.mxu0 0.0
      %972 = vmatpush1.msra.mxu0 %v220
      %973 = vmatprep.subr.mxu0 0.0
      %974 = vmatpush1.msra.mxu0 %v221
      %975 = vmatprep.subr.mxu0 0.0
      %976 = vmatpush1.msra.mxu0 %v222
      %977 = vmatprep.subr.mxu0 0.0
      %978 = vmatpush1.msra.mxu0 %v223
      %979 = vmatprep.subr.mxu0 0.0
      %980 = vmatpush1.msra.mxu0 %v224
      %981 = vmatprep.subr.mxu0 0.0
      %982 = vmatpush1.msra.mxu0 %v225
      %983 = vmatprep.subr.mxu0 0.0
      %984 = vmatpush1.msra.mxu0 %v226
      %985 = vmatprep.subr.mxu0 0.0
      %986 = vmatpush1.msra.mxu0 %v227
      %987 = vmatprep.subr.mxu0 0.0
      %988 = vmatpush1.msra.mxu0 0.0
      %989 = vmatprep.subr.mxu0 0.0
      %990 = vmatpush1.msra.mxu0 0.0
      %991 = vmatprep.subr.mxu0 0.0
      %992 = vmatpush1.msra.mxu0 0.0
      %993 = vmatprep.subr.mxu0 0.0
      %994 = vmatpush1.msra.mxu0 0.0
      %995 = vmatprep.subr.mxu0 0.0
      %996 = vmatpush1.msra.mxu0 0.0
      %997 = vmatprep.subr.mxu0 0.0
      %998 = vmatpush1.msra.mxu0 0.0
      %999 = vmatprep.subr.mxu0 0.0
      %1000 = vmatpush1.msra.mxu0 0.0
      %1001 = vmatprep.subr.mxu0 0.0
      %1002 = vmatpush1.msra.mxu0 0.0
      %1003 = vmatprep.subr.mxu0 0.0
      %1004 = vmatpush1.msra.mxu0 0.0
      %1005 = vmatprep.subr.mxu0 0.0
      %1006 = vmatpush1.msra.mxu0 0.0
      %1007 = vmatprep.subr.mxu0 0.0
      %1008 = vmatpush1.msra.mxu0 0.0
      %1009 = vmatprep.subr.mxu0 0.0
      %1010 = vmatpush1.msra.mxu0 0.0
      %1011 = vmatprep.subr.mxu0 0.0
      %1012 = vmatpush1.msra.mxu0 0.0
      %1013 = vmatprep.subr.mxu0 0.0
      %1014 = vmatpush1.msra.mxu0 0.0
      %1015 = vmatprep.subr.mxu0 0.0
      %1016 = vmatpush1.msra.mxu0 0.0
      %1017 = vmatprep.subr.mxu0 0.0
      %1018 = vmatpush1.msra.mxu0 0.0
      %1019 = vmatprep.subr.mxu0 0.0
      %1020 = vmatpush1.msra.mxu0 0.0
      %1021 = vmatprep.subr.mxu0 0.0
      %1022 = vmatpush1.msra.mxu0 0.0
      %1023 = vmatprep.subr.mxu0 0.0
      %1024 = vmatpush1.msra.mxu0 0.0
      %1025 = vmatprep.subr.mxu0 0.0
      %1026 = vmatpush1.msra.mxu0 0.0
      %1027 = vmatprep.subr.mxu0 0.0
      %1028 = vmatpush1.msra.mxu0 0.0
      %1029 = vmatprep.subr.mxu0 0.0
      %1030 = vmatpush1.msra.mxu0 0.0
      %1031 = vmatprep.subr.mxu0 0.0
      %1032 = vmatpush1.msra.mxu0 0.0
      %1033 = vmatprep.subr.mxu0 0.0
      %1034 = vmatpush1.msra.mxu0 0.0
      %1035 = vmatprep.mubr.f32.mxu0 0.0
      %1036 = vmatmul.mubr.f32.gmra.mrb[0].mxu0 %v966
      %v1037 = vpop.f32.mrb[0].mxu0
      %v1038 = vadd.f32 %v775, %v1037
      %v1039 = vpop.f32.mrb[0].mxu0
      %1040 = vmatprep.mubr.f32.mxu0 0.0
      %1041 = vmatmul.mubr.f32.gmra.mrb[0].mxu0 %v969
      %v1042 = vpop.f32.mrb[0].mxu0
      %v1043 = vadd.f32 %v780, %v1042
      %v1044 = vpop.f32.mrb[0].mxu0
      %1045 = vdwg.mxu0
      %v1046 = vmul.f32 %v1038, 64.0
      %v1047 = vmul.f32 %v1043, 64.0
      %v1048 = vsub.f32 %v1046, %v943
      %v1049 = vsub.f32 %v1047, %v944
      %v1050 = vsub.f32 %v1048, %v945
      %v1051 = vsub.f32 %v1049, %v946
      %v1052 = vadd.f32 %v1050, 3.6864
      %v1053 = vadd.f32 %v1051, 3.6864
      %v1054 = vmul.f32 %v963, %v1052
      %v1055 = vmul.f32 %v964, %v1053
      %v1056 = vrcp.pop %v1054
      %v1057 = vmul.f32 %v959, %v1056
      %v1058 = vrcp.pop %v1055
      %v1059 = vmul.f32 %v960, %v1058
      %vm1060 = vcmask 293888
      %v1061 = vsel %vm1060, %v1057, 0.0
      %vm1062 = vcmask 286720
      %v1063 = vsel %vm1062, %v1059, 0.0
      %v1064 = vadd.f32 %v1061, %v1063
      %1065 = vadd.xlane.f32.xlu0 %v1064
      %v1066 = vpop.xlane.xlu0 %1065
      %v1067 = vrot.slane %v1066, 4
      %v1068 = vadd.f32 %v1066, %v1067
      %v1069 = vrot.slane %v1068, 2
      %v1070 = vadd.f32 %v1068, %v1069
      %v1071 = vrot.slane %v1070, 1
      %v1072 = vadd.f32 %v1070, %v1071
      %s1073 = vtos %v1072
      %v1074 = vstv %s1073
      %v1075 = vrcp.pop 324.0
      %v1076 = vmul.f32 %v1074, %v1075
      %vm1077 = vcmask 0
      %1078 = vst.msk [vmem:[%s213] sm:$0x1] %vm1077, %v1076
      %p1079 = scmp.lt.s32.totalorder %s15, 1
      %s1080 = scalar_select %p1079, %s15, 1
      %s1081 = scalar_lea.vmem %s4, %s1080
      // Predicated region
      $region37: #{tpu_custom_call.1} parent=35 // pred_check
        %p1082 = pneg %p127
      $region38: #{tpu_custom_call.1} parent=35 // pred_check_branch
        %1084 = sbr.rel (%p1082) target = $region40
      $region39: #{tpu_custom_call.1} parent=35 // pred_region
        _
      $region40: #{tpu_custom_call.1} parent=35 // pred_fallthru
        _
    $region36: #{tpu_custom_call.1} parent=5 // pred_fallthru
      _
    %p1085 = scmp.le.s32.totalorder 2, %s10
    // Predicated region
    $region41: #{tpu_custom_call.1} parent=5 // pred_check
      %p1086 = pneg %p1085
    $region42: #{tpu_custom_call.1} parent=5 // pred_check_branch
      %1088 = sbr.rel (%p1086) target = $region44
    $region43: #{tpu_custom_call.1} parent=5 // pred_region
      %s1089 = ssub.s32 %s10, 2
      // Predicated region
      $region45: #{tpu_custom_call.1} parent=43 // pred_check
        %p1090 = pneg %p133
      $region46: #{tpu_custom_call.1} parent=43 // pred_check_branch
        %1092 = sbr.rel (%p1090) target = $region48
      $region47: #{tpu_custom_call.1} parent=43 // pred_region
        %p1093 = scmp.lt.s32.totalorder %s16, 1
        %s1094 = scalar_select %p1093, %s16, 1
        %s1095 = scalar_lea.vmem %s4, %s1094
      $region48: #{tpu_custom_call.1} parent=43 // pred_fallthru
        _
    $region44: #{tpu_custom_call.1} parent=5 // pred_fallthru
      _
  $region6: #{tpu_custom_call.1} parent=0 // loop_footer
    %s14 = sadd.s32 1, %s10
  $region7: #{tpu_custom_call.1} parent=0 // loop_footer_branch
    %9 = sbr.rel target = $region3
  $region8: #{tpu_custom_call.1} parent=0 // loop_exit
    _

</llo_original>
